<compile_context>
chip_gen: v7x
topology: tpu7x:2x2x1
jax: 0.10.0
libtpu: 0.0.40
codegen_flags: <defaults>
</compile_context>

<pallas_src>
import math
from functools import partial

import jax
import jax.numpy as jnp
from jax import lax
from jax.experimental import pallas as pl
from jax.experimental.pallas import tpu as pltpu


def _round_up(x, m):
    return -(-x // m) * m


def _make_decoder_kernel(num_rels, eps):
    """Kernel specialized for a metapath of `num_rels` relations.

    Ref order: (embeds1, embeds2, mat_T[0], ..., mat_T[num_rels-1], out).
    """

    def kernel(*refs):
        e1_ref, e2_ref = refs[0], refs[1]
        mat_refs = refs[2:2 + num_rels]
        o_ref = refs[2 + num_rels]

        # Column layout: act is (d_k, bn); lane dim = batch tile.
        act = e1_ref[...]
        for idx, m_ref in enumerate(mat_refs):
            acc = jnp.dot(m_ref[...], act, preferred_element_type=jnp.float32)
            # Keep bf16 on the MXU input path; only the last result stays f32
            # for the cosine epilogue.
            act = acc if idx == num_rels - 1 else acc.astype(m_ref.dtype)

        act = act.astype(jnp.float32)
        e2 = e2_ref[...].astype(jnp.float32)

        num = jnp.sum(act * e2, axis=0, keepdims=True)         # (1, bn)
        s1 = jnp.sum(act * act, axis=0, keepdims=True)
        s2 = jnp.sum(e2 * e2, axis=0, keepdims=True)
        # num / max(||a||*||b||, eps) == num * rsqrt(max(s1*s2, eps^2)); one EUP op.
        inv = lax.rsqrt(jnp.maximum(s1 * s2, eps * eps))
        o_ref[...] = (num * inv).astype(o_ref.dtype)

    return kernel


@partial(jax.jit, static_argnames=("block_n", "eps"))
def _forward_from_transposed(embeds1, embeds2, mats_t, *, block_n=512, eps=1e-8):
    """Forward pass. `mats_t` is a tuple of PRE-TRANSPOSED relation matrices
    (each (d_out, d_in)); the in-kernel chain is then act <- M.T @ act, keeping
    the lane dim on the batch tile."""
    d0, n = embeds1.shape
    dL, n2 = embeds2.shape
    assert n2 == n
    num_rels = len(mats_t)

    # Validate the metapath chain (mirrors act.mm(mat) chaining).
    d = d0
    for m in mats_t:
        assert m.shape[1] == d, "relation matrix chain dims mismatch"
        d = m.shape[0]
    assert d == dL, "final dim must match embeds2"

    # bf16 ingestion for both embedding streams (upcast to f32 inside the kernel).
    # All of this is fused under jit -> no extra eager dispatches.
    e1 = embeds1.astype(jnp.bfloat16)
    e2 = embeds2.astype(jnp.bfloat16)
    mats_bf16 = tuple(m.astype(jnp.bfloat16) for m in mats_t)  # no-op if cached bf16

    # Adaptive batch tile: default 512 lanes, shrunk to the smallest 256-multiple
    # that covers small batches (always a multiple of 128). No host-side padding:
    # Pallas masks the ragged last block on writeback.
    bn = _round_up(min(block_n, _round_up(n, 256)), 128)
    num_tiles = pl.cdiv(n, bn)

    in_specs = [
        pl.BlockSpec((d0, bn), lambda i: (0, i)),
        pl.BlockSpec((dL, bn), lambda i: (0, i)),
    ] + [
        # Full-array relation matrices; constant index_map -> resident in VMEM.
        pl.BlockSpec(m.shape, lambda i: (0, 0)) for m in mats_bf16
    ]
    out_specs = pl.BlockSpec((1, bn), lambda i: (0, i))

    n_cols = num_tiles * bn
    matmul_flops = 2 * n_cols * sum(int(m.shape[0]) * int(m.shape[1]) for m in mats_bf16)
    cosine_flops = 8 * n_cols * int(dL)
    bytes_accessed = (
        e1.size * e1.dtype.itemsize
        + e2.size * e2.dtype.itemsize
        + sum(m.size * m.dtype.itemsize for m in mats_bf16)
        + n * 4
    )

    out = pl.pallas_call(
        _make_decoder_kernel(num_rels, float(eps)),
        out_shape=jax.ShapeDtypeStruct((1, n), jnp.float32),
        grid_spec=pltpu.PrefetchScalarGridSpec(
            num_scalar_prefetch=0,
            grid=(num_tiles,),
            in_specs=in_specs,
            out_specs=out_specs,
        ),
        compiler_params=pltpu.CompilerParams(
            # Batch tiles are independent -> shard across TCs on v7x.
            dimension_semantics=("parallel",),
        ),
        cost_estimate=pl.CostEstimate(
            flops=matmul_flops + cosine_flops,
            transcendentals=n_cols,             # one rsqrt per column
            bytes_accessed=bytes_accessed,
        ),
    )(e1, e2, *mats_bf16)

    return out[0]


def bilinear_metapath_forward(embeds1, embeds2, mats, *, block_n=512, eps=1e-8):
    """Convenience wrapper taking relation matrices in the original (d_in, d_out)
    orientation (transposes them; the decoder class uses cached transposed copies)."""
    mats_t = tuple(jnp.swapaxes(jnp.asarray(m), 0, 1) for m in mats)
    return _forward_from_transposed(embeds1, embeds2, mats_t, block_n=block_n, eps=eps)


def xavier_uniform(key, shape):
    fan_in, fan_out = shape
    bound = math.sqrt(6.0 / (fan_in + fan_out))
    return jax.random.uniform(key, shape, jnp.float32, -bound, bound)


class BilinearMetapathDecoder:
    """JAX/Pallas port of the PyTorch BilinearMetapathDecoder (forward path)."""

    def __init__(self, relations, dims, key):
        self.relations = relations
        self.dims = dims
        self.mats = {}     # original orientation, f32 (matches the PyTorch Parameter)
        self.mats_t = {}   # cached pre-transposed bf16 copies for the kernel
        rels = []
        for r1 in relations:
            for r2 in relations[r1]:
                rels.append((r1, r2[1], r2[0]))
        keys = jax.random.split(key, len(rels))
        for rel, k in zip(rels, keys):
            m = xavier_uniform(k, (dims[rel[0]], dims[rel[2]]))
            self.mats[rel] = m
            self.mats_t[rel] = jnp.asarray(m).T.astype(jnp.bfloat16)

    def forward(self, embeds1, embeds2, rels):
        mats_t = tuple(self.mats_t[r] for r in rels)
        return _forward_from_transposed(embeds1, embeds2, mats_t)

    def project(self, embeds, rel):
        # Plain matmul (not the hot path) -> leave to XLA.
        return jnp.dot(self.mats[rel], embeds)


# ------------------------- references for testing ---------------------------

def reference_f32(embeds1, embeds2, mats, eps=1e-8):
    """Straight f32 port of the PyTorch forward."""
    act = embeds1.T
    for m in mats:
        act = act @ m
    act = act.T
    num = jnp.sum(act * embeds2, axis=0)
    denom = jnp.maximum(
        jnp.linalg.norm(act, axis=0) * jnp.linalg.norm(embeds2, axis=0), eps)
    return num / denom


def reference_matched(embeds1, embeds2, mats, eps=1e-8):
    """Same bf16-ingest / column-layout / f32-accumulate / rsqrt recipe as the kernel."""
    act = embeds1.astype(jnp.bfloat16)
    for idx, m in enumerate(mats):
        acc = jnp.dot(m.T.astype(jnp.bfloat16), act,
                      preferred_element_type=jnp.float32)
        act = acc if idx == len(mats) - 1 else acc.astype(jnp.bfloat16)
    act = act.astype(jnp.float32)
    e2 = embeds2.astype(jnp.bfloat16).astype(jnp.float32)
    num = jnp.sum(act * e2, axis=0)
    s1 = jnp.sum(act * act, axis=0)
    s2 = jnp.sum(e2 * e2, axis=0)
    return num * lax.rsqrt(jnp.maximum(s1 * s2, eps * eps))


if __name__ == "__main__":
    key = jax.random.PRNGKey(0)
    k_params, k_e1, k_e2 = jax.random.split(key, 3)

    # Two node modes; metapath A --r1--> B --r2--> A (chain of two relation mats).
    dims = {"A": 128, "B": 64}
    relations = {"A": [("B", "r1")], "B": [("A", "r2")]}
    metapath = [("A", "r1", "B"), ("B", "r2", "A")]

    batch = 200  # not a multiple of 128/256: exercises the unpadded ragged edge block

    decoder = BilinearMetapathDecoder(relations, dims, k_params)
    embeds1 = jax.random.normal(k_e1, (dims["A"], batch), jnp.float32)
    embeds2 = jax.random.normal(k_e2, (dims["A"], batch), jnp.float32)

    out = decoder.forward(embeds1, embeds2, metapath)
    out = jax.block_until_ready(out)

    mats = [decoder.mats[r] for r in metapath]
    ref_bits = reference_matched(embeds1, embeds2, mats)   # same precision recipe
    ref_full = reference_f32(embeds1, embeds2, mats)       # pure-f32 sanity check

    assert out.shape == (batch,)
    assert bool(jnp.all(jnp.isfinite(out))), "non-finite values in output"
    assert jnp.allclose(out, ref_bits, atol=3e-3, rtol=3e-3), \
        "mismatch vs matched-precision reference"
    # bf16 ingestion of both embedding streams loosens agreement with pure f32.
    assert jnp.allclose(out, ref_full, atol=3e-2, rtol=3e-2), \
        "mismatch vs f32 reference"

    # Also exercise the raw-mats convenience wrapper once.
    out2 = jax.block_until_ready(bilinear_metapath_forward(embeds1, embeds2, mats))
    assert jnp.allclose(out, out2, atol=1e-6, rtol=1e-6)

    print("KERNEL_OK")
</pallas_src>

<mosaic_0001>
module attributes {stable_mosaic.version = 11 : i64} {
  func.func @kernel(%arg0: i32, %arg1: memref<128x256xbf16, #tpu.memory_space<vmem>>, %arg2: memref<128x256xbf16, #tpu.memory_space<vmem>>, %arg3: memref<64x128xbf16, #tpu.memory_space<vmem>>, %arg4: memref<128x64xbf16, #tpu.memory_space<vmem>>, %arg5: memref<1x256xf32, #tpu.memory_space<vmem>>) attributes {dimension_semantics = [#tpu.dimension_semantics<parallel>], iteration_bounds = array<i64: 1>, scalar_prefetch = 0 : i64, scratch_operands = 0 : i64, tpu.core_type = #tpu.core_type<tc>, window_params = [{transform_indices = @transform_0, window_bounds = array<i64: 128, 256>}, {transform_indices = @transform_1, window_bounds = array<i64: 128, 256>}, {pipeline_mode = #tpu.pipeline_mode<synchronous>, transform_indices = @transform_2, window_bounds = array<i64: 64, 128>}, {pipeline_mode = #tpu.pipeline_mode<synchronous>, transform_indices = @transform_3, window_bounds = array<i64: 128, 64>}, {transform_indices = @transform_4, window_bounds = array<i64: 1, 256>}]} {
    %c0 = arith.constant 0 : index
    %c0_0 = arith.constant 0 : index
    %0 = vector.load %arg1[%c0, %c0_0] : memref<128x256xbf16, #tpu.memory_space<vmem>>, vector<128x256xbf16>
    %c0_1 = arith.constant 0 : index
    %c0_2 = arith.constant 0 : index
    %1 = vector.load %arg3[%c0_1, %c0_2] : memref<64x128xbf16, #tpu.memory_space<vmem>>, vector<64x128xbf16>
    %cst = arith.constant dense<0.000000e+00> : vector<64x256xf32>
    %2 = tpu.matmul %1, %0, %cst {dimension_numbers = #tpu.dot_dimension_numbers<[1], [0], [0], [1], [0, 0, 1, 1], [], []>} : vector<64x128xbf16>, vector<128x256xbf16>, vector<64x256xf32> -> vector<64x256xf32>
    %3 = arith.truncf %2 : vector<64x256xf32> to vector<64x256xbf16>
    %c0_3 = arith.constant 0 : index
    %c0_4 = arith.constant 0 : index
    %4 = vector.load %arg4[%c0_3, %c0_4] : memref<128x64xbf16, #tpu.memory_space<vmem>>, vector<128x64xbf16>
    %cst_5 = arith.constant dense<0.000000e+00> : vector<128x256xf32>
    %5 = tpu.matmul %4, %3, %cst_5 {dimension_numbers = #tpu.dot_dimension_numbers<[1], [0], [0], [1], [0, 0, 1, 1], [], []>} : vector<128x64xbf16>, vector<64x256xbf16>, vector<128x256xf32> -> vector<128x256xf32>
    %c0_6 = arith.constant 0 : index
    %c0_7 = arith.constant 0 : index
    %6 = vector.load %arg2[%c0_6, %c0_7] : memref<128x256xbf16, #tpu.memory_space<vmem>>, vector<128x256xbf16>
    %7 = arith.extf %6 : vector<128x256xbf16> to vector<128x256xf32>
    %8 = arith.mulf %5, %7 : vector<128x256xf32>
    %cst_8 = arith.constant dense<0.000000e+00> : vector<256xf32>
    %9 = vector.multi_reduction <add>, %8, %cst_8 [0] : vector<128x256xf32> to vector<256xf32>
    %10 = vector.shape_cast %9 : vector<256xf32> to vector<1x256xf32>
    %11 = arith.mulf %5, %5 : vector<128x256xf32>
    %cst_9 = arith.constant dense<0.000000e+00> : vector<256xf32>
    %12 = vector.multi_reduction <add>, %11, %cst_9 [0] : vector<128x256xf32> to vector<256xf32>
    %13 = vector.shape_cast %12 : vector<256xf32> to vector<1x256xf32>
    %14 = arith.mulf %7, %7 : vector<128x256xf32>
    %cst_10 = arith.constant dense<0.000000e+00> : vector<256xf32>
    %15 = vector.multi_reduction <add>, %14, %cst_10 [0] : vector<128x256xf32> to vector<256xf32>
    %16 = vector.shape_cast %15 : vector<256xf32> to vector<1x256xf32>
    %17 = arith.mulf %13, %16 : vector<1x256xf32>
    %cst_11 = arith.constant 1.000000e-16 : f32
    %18 = vector.broadcast %cst_11 : f32 to vector<1x256xf32>
    %19 = arith.maximumf %17, %18 : vector<1x256xf32>
    %20 = math.rsqrt %19 : vector<1x256xf32>
    %21 = arith.mulf %10, %20 : vector<1x256xf32>
    %c0_12 = arith.constant 0 : index
    %c0_13 = arith.constant 0 : index
    %22 = vector.load %arg5[%c0_12, %c0_13] : memref<1x256xf32, #tpu.memory_space<vmem>>, vector<1x256xf32>
    tpu.vector_store %arg5[%c0_12, %c0_13], %21 {strides = array<i32>} : memref<1x256xf32, #tpu.memory_space<vmem>>, vector<1x256xf32>,
    return
  }
  func.func @transform_0(%arg0: i32) -> (i32, i32) {
    %c0_i32 = arith.constant 0 : i32
    %c0_i32_0 = arith.constant 0 : i32
    return %c0_i32, %arg0 : i32, i32
  }
  func.func @transform_1(%arg0: i32) -> (i32, i32) {
    %c0_i32 = arith.constant 0 : i32
    %c0_i32_0 = arith.constant 0 : i32
    return %c0_i32, %arg0 : i32, i32
  }
  func.func @transform_2(%arg0: i32) -> (i32, i32) {
    %c0_i32 = arith.constant 0 : i32
    %c0_i32_0 = arith.constant 0 : i32
    %c0_i32_1 = arith.constant 0 : i32
    return %c0_i32, %c0_i32_0 : i32, i32
  }
  func.func @transform_3(%arg0: i32) -> (i32, i32) {
    %c0_i32 = arith.constant 0 : i32
    %c0_i32_0 = arith.constant 0 : i32
    %c0_i32_1 = arith.constant 0 : i32
    return %c0_i32, %c0_i32_0 : i32, i32
  }
  func.func @transform_4(%arg0: i32) -> (i32, i32) {
    %c0_i32 = arith.constant 0 : i32
    %c0_i32_0 = arith.constant 0 : i32
    return %c0_i32, %arg0 : i32, i32
  }
}

</mosaic_0001>

<llo_original>
// kernel: _forward_from_transposed.1
$region0: #{_forward_from_transposed.1}
  #allocation0 [shape = 'u32[]', space=smem, size = 0x4, offset = 0x4, fixed_abs, tag = 'smem constant byte address 0x4 - core index']
  #allocation1 [shape = 'u32[144,128]{1,0:T(1,128)}', space=vmem, size = 0x12000, scoped, tag = 'internal scratch']
  %s0 = inlined_call_operand.vmem [shape: bf16[128,200], index: 0, kind: input, shape index: {}]
  %s1 = inlined_call_operand.vmem [shape: bf16[128,200], index: 1, kind: input, shape index: {}]
  %s2 = inlined_call_operand.vmem [shape: bf16[64,128], index: 2, kind: input, shape index: {}]
  %s3 = inlined_call_operand.vmem [shape: bf16[128,64], index: 3, kind: input, shape index: {}]
  %s4 = inlined_call_operand.hbm [shape: f32[1,200], index: 4, kind: output, shape index: {}]
  %s5 = sld [smem:[#allocation0]]
  $region26: #{_forward_from_transposed.1} parent=0
    _
  %s7 = ssub.s32 1, %s5
  %s8 = scalar_select 0, %s7, %s5
  $region1: #{_forward_from_transposed.1} parent=0
    #allocation2 [shape = 'u8[1024]{0}', space=vmem, size = 0x400, scoped, tag = 'output window, operand 0, single buffered']
    #allocation3 [shape = 's32[1]{0}', space=sflag, size = 0x4, scoped, tag = 'scoped memory for _forward_from_transposed.1']
    %9 = vsyncpa [#allocation3], 0
    // Predicated region
    $region2: #{_forward_from_transposed.1} parent=1 // pred_check
      _
    $region3: #{_forward_from_transposed.1} parent=1 // pred_check_branch
      %11 = sbr.rel (0) target = $region5
    $region4: #{_forward_from_transposed.1} parent=1 // pred_region
      _
    $region5: #{_forward_from_transposed.1} parent=1 // pred_fallthru
      _
    // Predicated region
    $region6: #{_forward_from_transposed.1} parent=1 // pred_check
      _
    $region7: #{_forward_from_transposed.1} parent=1 // pred_check_branch
      %13 = sbr.rel (0) target = $region9
    $region8: #{_forward_from_transposed.1} parent=1 // pred_region
      _
    $region9: #{_forward_from_transposed.1} parent=1 // pred_fallthru
      _
    // Predicated region
    $region10: #{_forward_from_transposed.1} parent=1 // pred_check
      _
    $region11: #{_forward_from_transposed.1} parent=1 // pred_check_branch
      %15 = sbr.rel (0) target = $region13
    $region12: #{_forward_from_transposed.1} parent=1 // pred_region
      _
    $region13: #{_forward_from_transposed.1} parent=1 // pred_fallthru
      _
    // Predicated region
    $region14: #{_forward_from_transposed.1} parent=1 // pred_check
      _
    $region15: #{_forward_from_transposed.1} parent=1 // pred_check_branch
      %17 = sbr.rel (0) target = $region17
    $region16: #{_forward_from_transposed.1} parent=1 // pred_region
      _
    $region17: #{_forward_from_transposed.1} parent=1 // pred_fallthru
      _
    %v19 = vld [vmem:[%s0] sm:$0xff]
    %v20 = vld [vmem:[%s0 + $0x8] sm:$0xff]
    %v21 = vld [vmem:[%s0 + $0x10] sm:$0xff]
    %v22 = vld [vmem:[%s0 + $0x18] sm:$0xff]
    %v23 = vld [vmem:[%s0 + $0x20] sm:$0xff]
    %v24 = vld [vmem:[%s0 + $0x28] sm:$0xff]
    %v25 = vld [vmem:[%s0 + $0x30] sm:$0xff]
    %v26 = vld [vmem:[%s0 + $0x38] sm:$0xff]
    %v27 = vld [vmem:[%s0 + $0x40] sm:$0xff]
    %v28 = vld [vmem:[%s0 + $0x48] sm:$0xff]
    %v29 = vld [vmem:[%s0 + $0x50] sm:$0xff]
    %v30 = vld [vmem:[%s0 + $0x58] sm:$0xff]
    %v31 = vld [vmem:[%s0 + $0x60] sm:$0xff]
    %v32 = vld [vmem:[%s0 + $0x68] sm:$0xff]
    %v33 = vld [vmem:[%s0 + $0x70] sm:$0xff]
    %v34 = vld [vmem:[%s0 + $0x78] sm:$0xff]
    %v35 = vld [vmem:[%s2] sm:$0xf]
    %v36 = vld [vmem:[%s2 + $0x4] sm:$0xf]
    %v37 = vld [vmem:[%s2 + $0x8] sm:$0xf]
    %v38 = vld [vmem:[%s2 + $0xc] sm:$0xf]
    %v39 = vld [vmem:[%s2 + $0x10] sm:$0xf]
    %v40 = vld [vmem:[%s2 + $0x14] sm:$0xf]
    %v41 = vld [vmem:[%s2 + $0x18] sm:$0xf]
    %v42 = vld [vmem:[%s2 + $0x1c] sm:$0xf]
    %v51 = vunpack.c.l.b16 %v35
    %v52 = vunpack.c.l.b16 %v36
    %v53 = vunpack.c.l.b16 %v37
    %v54 = vunpack.c.l.b16 %v38
    %v55 = vunpack.c.l.b16 %v39
    %v56 = vunpack.c.l.b16 %v40
    %v57 = vunpack.c.l.b16 %v41
    %v58 = vunpack.c.l.b16 %v42
    %v59 = vpack.c.b16 %v52, %v51
    %v60 = vpack.c.b16 %v54, %v53
    %v61 = vpack.c.b16 %v56, %v55
    %v62 = vpack.c.b16 %v58, %v57
    %v83 = vunpack.c.l.b16 %v19
    %v84 = vunpack.c.h.b16 %v19
    %v85 = vunpack.c.l.b16 %v20
    %v86 = vunpack.c.h.b16 %v20
    %v87 = vunpack.c.l.b16 %v21
    %v88 = vunpack.c.h.b16 %v21
    %v89 = vunpack.c.l.b16 %v22
    %v90 = vunpack.c.h.b16 %v22
    %v91 = vunpack.c.l.b16 %v23
    %v92 = vunpack.c.h.b16 %v23
    %v93 = vunpack.c.l.b16 %v24
    %v94 = vunpack.c.h.b16 %v24
    %v95 = vunpack.c.l.b16 %v25
    %v96 = vunpack.c.h.b16 %v25
    %v97 = vunpack.c.l.b16 %v26
    %v98 = vunpack.c.h.b16 %v26
    %v99 = vunpack.c.l.b16 %v27
    %v100 = vunpack.c.h.b16 %v27
    %v101 = vunpack.c.l.b16 %v28
    %v102 = vunpack.c.h.b16 %v28
    %v103 = vunpack.c.l.b16 %v29
    %v104 = vunpack.c.h.b16 %v29
    %v105 = vunpack.c.l.b16 %v30
    %v106 = vunpack.c.h.b16 %v30
    %v107 = vunpack.c.l.b16 %v31
    %v108 = vunpack.c.h.b16 %v31
    %v109 = vunpack.c.l.b16 %v32
    %v110 = vunpack.c.h.b16 %v32
    %v111 = vunpack.c.l.b16 %v33
    %v112 = vunpack.c.h.b16 %v33
    %v113 = vunpack.c.l.b16 %v34
    %v114 = vunpack.c.h.b16 %v34
    %v115 = vpack.c.b16 %v85, %v83
    %v116 = vpack.c.b16 %v86, %v84
    %v117 = vpack.c.b16 %v89, %v87
    %v118 = vpack.c.b16 %v90, %v88
    %v119 = vpack.c.b16 %v93, %v91
    %v120 = vpack.c.b16 %v94, %v92
    %v121 = vpack.c.b16 %v97, %v95
    %v122 = vpack.c.b16 %v98, %v96
    %v123 = vpack.c.b16 %v101, %v99
    %v124 = vpack.c.b16 %v102, %v100
    %v125 = vpack.c.b16 %v105, %v103
    %v126 = vpack.c.b16 %v106, %v104
    %v127 = vpack.c.b16 %v109, %v107
    %v128 = vpack.c.b16 %v110, %v108
    %v129 = vpack.c.b16 %v113, %v111
    %v130 = vpack.c.b16 %v114, %v112
    %147 = vmatprep.subr.bf16.mxu0 %v116
    %148 = vmatpush1.bf16.msra.mxu0 %v115
    %149 = vmatprep.subr.bf16.mxu0 %v118
    %150 = vmatpush1.bf16.msra.mxu0 %v117
    %151 = vmatprep.subr.bf16.mxu0 %v120
    %152 = vmatpush1.bf16.msra.mxu0 %v119
    %153 = vmatprep.subr.bf16.mxu0 %v122
    %154 = vmatpush1.bf16.msra.mxu0 %v121
    %155 = vmatprep.subr.bf16.mxu0 %v124
    %156 = vmatpush1.bf16.msra.mxu0 %v123
    %157 = vmatprep.subr.bf16.mxu0 %v126
    %158 = vmatpush1.bf16.msra.mxu0 %v125
    %159 = vmatprep.subr.bf16.mxu0 %v128
    %160 = vmatpush1.bf16.msra.mxu0 %v127
    %161 = vmatprep.subr.bf16.mxu0 %v130
    %162 = vmatpush1.bf16.msra.mxu0 %v129
    %163 = vmatprep.subr.bf16.mxu0 0
    %164 = vmatpush1.bf16.msra.mxu0 0
    %165 = vmatprep.subr.bf16.mxu0 0
    %166 = vmatpush1.bf16.msra.mxu0 0
    %167 = vmatprep.subr.bf16.mxu0 0
    %168 = vmatpush1.bf16.msra.mxu0 0
    %169 = vmatprep.subr.bf16.mxu0 0
    %170 = vmatpush1.bf16.msra.mxu0 0
    %171 = vmatprep.subr.bf16.mxu0 0
    %172 = vmatpush1.bf16.msra.mxu0 0
    %173 = vmatprep.subr.bf16.mxu0 0
    %174 = vmatpush1.bf16.msra.mxu0 0
    %175 = vmatprep.subr.bf16.mxu0 0
    %176 = vmatpush1.bf16.msra.mxu0 0
    %177 = vmatprep.subr.bf16.mxu0 0
    %178 = vmatpush1.bf16.msra.mxu0 0
    %179 = vmatprep.mubr.bf16.mxu0 0
    %180 = vmatmul.mubr.bf16.gmra.mrb[0].mxu0 %v59
    %v181 = vpop.f32.mrb[0].mxu0
    %v182 = vadd.f32 0.0, %v181
    %v183 = vpop.f32.mrb[0].mxu0
    %v184 = vadd.f32 0.0, %v183
    %v185 = vpop.f32.mrb[0].mxu0
    %v186 = vadd.f32 0.0, %v185
    %v187 = vpop.f32.mrb[0].mxu0
    %v188 = vadd.f32 0.0, %v187
    %189 = vmatprep.mubr.bf16.mxu0 0
    %190 = vmatmul.mubr.bf16.gmra.mrb[0].mxu0 %v60
    %v191 = vpop.f32.mrb[0].mxu0
    %v192 = vadd.f32 0.0, %v191
    %v193 = vpop.f32.mrb[0].mxu0
    %v194 = vadd.f32 0.0, %v193
    %v195 = vpop.f32.mrb[0].mxu0
    %v196 = vadd.f32 0.0, %v195
    %v197 = vpop.f32.mrb[0].mxu0
    %v198 = vadd.f32 0.0, %v197
    %199 = vmatprep.mubr.bf16.mxu0 0
    %200 = vmatmul.mubr.bf16.gmra.mrb[0].mxu0 %v61
    %v201 = vpop.f32.mrb[0].mxu0
    %v202 = vadd.f32 0.0, %v201
    %v203 = vpop.f32.mrb[0].mxu0
    %v204 = vadd.f32 0.0, %v203
    %v205 = vpop.f32.mrb[0].mxu0
    %v206 = vadd.f32 0.0, %v205
    %v207 = vpop.f32.mrb[0].mxu0
    %v208 = vadd.f32 0.0, %v207
    %209 = vmatprep.mubr.bf16.mxu0 0
    %210 = vmatmul.mubr.bf16.gmra.mrb[0].mxu0 %v62
    %v211 = vpop.f32.mrb[0].mxu0
    %v212 = vadd.f32 0.0, %v211
    %v213 = vpop.f32.mrb[0].mxu0
    %v214 = vadd.f32 0.0, %v213
    %v215 = vpop.f32.mrb[0].mxu0
    %v216 = vadd.f32 0.0, %v215
    %v217 = vpop.f32.mrb[0].mxu0
    %v218 = vadd.f32 0.0, %v217
    %219 = vdwg.mxu0
    %v220 = vpack.c.bf16 %v186, %v182
    %v221 = vpack.c.bf16 %v188, %v184
    %v222 = vpack.c.bf16 %v196, %v192
    %v223 = vpack.c.bf16 %v198, %v194
    %v224 = vpack.c.bf16 %v206, %v202
    %v225 = vpack.c.bf16 %v208, %v204
    %v226 = vpack.c.bf16 %v216, %v212
    %v227 = vpack.c.bf16 %v218, %v214
    %v228 = vld [vmem:[%s3] sm:$0xf]
    %v229 = vld [vmem:[%s3 + $0x4] sm:$0xf]
    %v230 = vld [vmem:[%s3 + $0x8] sm:$0xf]
    %v231 = vld [vmem:[%s3 + $0xc] sm:$0xf]
    %v232 = vld [vmem:[%s3 + $0x10] sm:$0xf]
    %v233 = vld [vmem:[%s3 + $0x14] sm:$0xf]
    %v234 = vld [vmem:[%s3 + $0x18] sm:$0xf]
    %v235 = vld [vmem:[%s3 + $0x1c] sm:$0xf]
    %v236 = vld [vmem:[%s3 + $0x20] sm:$0xf]
    %v237 = vld [vmem:[%s3 + $0x24] sm:$0xf]
    %v238 = vld [vmem:[%s3 + $0x28] sm:$0xf]
    %v239 = vld [vmem:[%s3 + $0x2c] sm:$0xf]
    %v240 = vld [vmem:[%s3 + $0x30] sm:$0xf]
    %v241 = vld [vmem:[%s3 + $0x34] sm:$0xf]
    %v242 = vld [vmem:[%s3 + $0x38] sm:$0xf]
    %v243 = vld [vmem:[%s3 + $0x3c] sm:$0xf]
    %v260 = vunpack.c.l.b16 %v228
    %v261 = vunpack.c.l.b16 %v229
    %v262 = vunpack.c.l.b16 %v230
    %v263 = vunpack.c.l.b16 %v231
    %v264 = vunpack.c.l.b16 %v232
    %v265 = vunpack.c.l.b16 %v233
    %v266 = vunpack.c.l.b16 %v234
    %v267 = vunpack.c.l.b16 %v235
    %v268 = vunpack.c.l.b16 %v236
    %v269 = vunpack.c.l.b16 %v237
    %v270 = vunpack.c.l.b16 %v238
    %v271 = vunpack.c.l.b16 %v239
    %v272 = vunpack.c.l.b16 %v240
    %v273 = vunpack.c.l.b16 %v241
    %v274 = vunpack.c.l.b16 %v242
    %v275 = vunpack.c.l.b16 %v243
    %v276 = vpack.c.b16 %v261, %v260
    %v277 = vpack.c.b16 %v263, %v262
    %v278 = vpack.c.b16 %v265, %v264
    %v279 = vpack.c.b16 %v267, %v266
    %v280 = vpack.c.b16 %v269, %v268
    %v281 = vpack.c.b16 %v271, %v270
    %v282 = vpack.c.b16 %v273, %v272
    %v283 = vpack.c.b16 %v275, %v274
    %vm284 = vcmask 523264
    %v286 = vsel %vm284, %v276, 0
    %v289 = vsel %vm284, %v277, 0
    %v292 = vsel %vm284, %v278, 0
    %v295 = vsel %vm284, %v279, 0
    %v298 = vsel %vm284, %v280, 0
    %v301 = vsel %vm284, %v281, 0
    %v304 = vsel %vm284, %v282, 0
    %v307 = vsel %vm284, %v283, 0
    %309 = vmatprep.subr.bf16.mxu0 %v221
    %310 = vmatpush1.bf16.msra.mxu0 %v220
    %311 = vmatprep.subr.bf16.mxu0 %v223
    %312 = vmatpush1.bf16.msra.mxu0 %v222
    %313 = vmatprep.subr.bf16.mxu0 %v225
    %314 = vmatpush1.bf16.msra.mxu0 %v224
    %315 = vmatprep.subr.bf16.mxu0 %v227
    %316 = vmatpush1.bf16.msra.mxu0 %v226
    %317 = vmatprep.subr.bf16.mxu0 0
    %318 = vmatpush1.bf16.msra.mxu0 0
    %319 = vmatprep.subr.bf16.mxu0 0
    %320 = vmatpush1.bf16.msra.mxu0 0
    %321 = vmatprep.subr.bf16.mxu0 0
    %322 = vmatpush1.bf16.msra.mxu0 0
    %323 = vmatprep.subr.bf16.mxu0 0
    %324 = vmatpush1.bf16.msra.mxu0 0
    %325 = vmatprep.subr.bf16.mxu0 0
    %326 = vmatpush1.bf16.msra.mxu0 0
    %327 = vmatprep.subr.bf16.mxu0 0
    %328 = vmatpush1.bf16.msra.mxu0 0
    %329 = vmatprep.subr.bf16.mxu0 0
    %330 = vmatpush1.bf16.msra.mxu0 0
    %331 = vmatprep.subr.bf16.mxu0 0
    %332 = vmatpush1.bf16.msra.mxu0 0
    %333 = vmatprep.subr.bf16.mxu0 0
    %334 = vmatpush1.bf16.msra.mxu0 0
    %335 = vmatprep.subr.bf16.mxu0 0
    %336 = vmatpush1.bf16.msra.mxu0 0
    %337 = vmatprep.subr.bf16.mxu0 0
    %338 = vmatpush1.bf16.msra.mxu0 0
    %339 = vmatprep.subr.bf16.mxu0 0
    %340 = vmatpush1.bf16.msra.mxu0 0
    %341 = vmatprep.mubr.bf16.mxu0 0
    %342 = vmatmul.mubr.bf16.gmra.mrb[0].mxu0 %v286
    %v343 = vpop.f32.mrb[0].mxu0
    %v344 = vadd.f32 0.0, %v343
    %v345 = vpop.f32.mrb[0].mxu0
    %v346 = vadd.f32 0.0, %v345
    %v347 = vpop.f32.mrb[0].mxu0
    %v348 = vadd.f32 0.0, %v347
    %v349 = vpop.f32.mrb[0].mxu0
    %v350 = vadd.f32 0.0, %v349
    %351 = vmatprep.mubr.bf16.mxu0 0
    %352 = vmatmul.mubr.bf16.gmra.mrb[0].mxu0 %v289
    %v353 = vpop.f32.mrb[0].mxu0
    %v354 = vadd.f32 0.0, %v353
    %v355 = vpop.f32.mrb[0].mxu0
    %v356 = vadd.f32 0.0, %v355
    %v357 = vpop.f32.mrb[0].mxu0
    %v358 = vadd.f32 0.0, %v357
    %v359 = vpop.f32.mrb[0].mxu0
    %v360 = vadd.f32 0.0, %v359
    %361 = vmatprep.mubr.bf16.mxu0 0
    %362 = vmatmul.mubr.bf16.gmra.mrb[0].mxu0 %v292
    %v363 = vpop.f32.mrb[0].mxu0
    %v364 = vadd.f32 0.0, %v363
    %v365 = vpop.f32.mrb[0].mxu0
    %v366 = vadd.f32 0.0, %v365
    %v367 = vpop.f32.mrb[0].mxu0
    %v368 = vadd.f32 0.0, %v367
    %v369 = vpop.f32.mrb[0].mxu0
    %v370 = vadd.f32 0.0, %v369
    %371 = vmatprep.mubr.bf16.mxu0 0
    %372 = vmatmul.mubr.bf16.gmra.mrb[0].mxu0 %v295
    %v373 = vpop.f32.mrb[0].mxu0
    %v374 = vadd.f32 0.0, %v373
    %v375 = vpop.f32.mrb[0].mxu0
    %v376 = vadd.f32 0.0, %v375
    %v377 = vpop.f32.mrb[0].mxu0
    %v378 = vadd.f32 0.0, %v377
    %v379 = vpop.f32.mrb[0].mxu0
    %v380 = vadd.f32 0.0, %v379
    %381 = vmatprep.mubr.bf16.mxu0 0
    %382 = vmatmul.mubr.bf16.gmra.mrb[0].mxu0 %v298
    %v383 = vpop.f32.mrb[0].mxu0
    %v384 = vadd.f32 0.0, %v383
    %v385 = vpop.f32.mrb[0].mxu0
    %v386 = vadd.f32 0.0, %v385
    %v387 = vpop.f32.mrb[0].mxu0
    %v388 = vadd.f32 0.0, %v387
    %v389 = vpop.f32.mrb[0].mxu0
    %v390 = vadd.f32 0.0, %v389
    %391 = vmatprep.mubr.bf16.mxu0 0
    %392 = vmatmul.mubr.bf16.gmra.mrb[0].mxu0 %v301
    %v393 = vpop.f32.mrb[0].mxu0
    %v394 = vadd.f32 0.0, %v393
    %v395 = vpop.f32.mrb[0].mxu0
    %v396 = vadd.f32 0.0, %v395
    %v397 = vpop.f32.mrb[0].mxu0
    %v398 = vadd.f32 0.0, %v397
    %v399 = vpop.f32.mrb[0].mxu0
    %v400 = vadd.f32 0.0, %v399
    %401 = vmatprep.mubr.bf16.mxu0 0
    %402 = vmatmul.mubr.bf16.gmra.mrb[0].mxu0 %v304
    %v403 = vpop.f32.mrb[0].mxu0
    %v404 = vadd.f32 0.0, %v403
    %v405 = vpop.f32.mrb[0].mxu0
    %v406 = vadd.f32 0.0, %v405
    %v407 = vpop.f32.mrb[0].mxu0
    %v408 = vadd.f32 0.0, %v407
    %v409 = vpop.f32.mrb[0].mxu0
    %v410 = vadd.f32 0.0, %v409
    %411 = vmatprep.mubr.bf16.mxu0 0
    %412 = vmatmul.mubr.bf16.gmra.mrb[0].mxu0 %v307
    %v413 = vpop.f32.mrb[0].mxu0
    %v414 = vadd.f32 0.0, %v413
    %v415 = vpop.f32.mrb[0].mxu0
    %v416 = vadd.f32 0.0, %v415
    %v417 = vpop.f32.mrb[0].mxu0
    %v418 = vadd.f32 0.0, %v417
    %v419 = vpop.f32.mrb[0].mxu0
    %v420 = vadd.f32 0.0, %v419
    %421 = vdwg.mxu0
    %v422 = vld [vmem:[%s1] sm:$0xff]
    %v423 = vld [vmem:[%s1 + $0x8] sm:$0xff]
    %v424 = vld [vmem:[%s1 + $0x10] sm:$0xff]
    %v425 = vld [vmem:[%s1 + $0x18] sm:$0xff]
    %v426 = vld [vmem:[%s1 + $0x20] sm:$0xff]
    %v427 = vld [vmem:[%s1 + $0x28] sm:$0xff]
    %v428 = vld [vmem:[%s1 + $0x30] sm:$0xff]
    %v429 = vld [vmem:[%s1 + $0x38] sm:$0xff]
    %v430 = vld [vmem:[%s1 + $0x40] sm:$0xff]
    %v431 = vld [vmem:[%s1 + $0x48] sm:$0xff]
    %v432 = vld [vmem:[%s1 + $0x50] sm:$0xff]
    %v433 = vld [vmem:[%s1 + $0x58] sm:$0xff]
    %v434 = vld [vmem:[%s1 + $0x60] sm:$0xff]
    %v435 = vld [vmem:[%s1 + $0x68] sm:$0xff]
    %v436 = vld [vmem:[%s1 + $0x70] sm:$0xff]
    %v437 = vld [vmem:[%s1 + $0x78] sm:$0xff]
    %v438 = vunpack.c.l.bf16 %v422
    %v439 = vunpack.c.h.bf16 %v422
    %v440 = vunpack.c.l.bf16 %v423
    %v441 = vunpack.c.h.bf16 %v423
    %v442 = vunpack.c.l.bf16 %v424
    %v443 = vunpack.c.h.bf16 %v424
    %v444 = vunpack.c.l.bf16 %v425
    %v445 = vunpack.c.h.bf16 %v425
    %v446 = vunpack.c.l.bf16 %v426
    %v447 = vunpack.c.h.bf16 %v426
    %v448 = vunpack.c.l.bf16 %v427
    %v449 = vunpack.c.h.bf16 %v427
    %v450 = vunpack.c.l.bf16 %v428
    %v451 = vunpack.c.h.bf16 %v428
    %v452 = vunpack.c.l.bf16 %v429
    %v453 = vunpack.c.h.bf16 %v429
    %v454 = vunpack.c.l.bf16 %v430
    %v455 = vunpack.c.h.bf16 %v430
    %v456 = vunpack.c.l.bf16 %v431
    %v457 = vunpack.c.h.bf16 %v431
    %v458 = vunpack.c.l.bf16 %v432
    %v459 = vunpack.c.h.bf16 %v432
    %v460 = vunpack.c.l.bf16 %v433
    %v461 = vunpack.c.h.bf16 %v433
    %v462 = vunpack.c.l.bf16 %v434
    %v463 = vunpack.c.h.bf16 %v434
    %v464 = vunpack.c.l.bf16 %v435
    %v465 = vunpack.c.h.bf16 %v435
    %v466 = vunpack.c.l.bf16 %v436
    %v467 = vunpack.c.h.bf16 %v436
    %v468 = vunpack.c.l.bf16 %v437
    %v469 = vunpack.c.h.bf16 %v437
    %v470 = vmul.f32 %v344, %v438
    %v471 = vmul.f32 %v346, %v439
    %v472 = vmul.f32 %v348, %v440
    %v473 = vmul.f32 %v350, %v441
    %v474 = vmul.f32 %v354, %v442
    %v475 = vmul.f32 %v356, %v443
    %v476 = vmul.f32 %v358, %v444
    %v477 = vmul.f32 %v360, %v445
    %v478 = vmul.f32 %v364, %v446
    %v479 = vmul.f32 %v366, %v447
    %v480 = vmul.f32 %v368, %v448
    %v481 = vmul.f32 %v370, %v449
    %v482 = vmul.f32 %v374, %v450
    %v483 = vmul.f32 %v376, %v451
    %v484 = vmul.f32 %v378, %v452
    %v485 = vmul.f32 %v380, %v453
    %v486 = vmul.f32 %v384, %v454
    %v487 = vmul.f32 %v386, %v455
    %v488 = vmul.f32 %v388, %v456
    %v489 = vmul.f32 %v390, %v457
    %v490 = vmul.f32 %v394, %v458
    %v491 = vmul.f32 %v396, %v459
    %v492 = vmul.f32 %v398, %v460
    %v493 = vmul.f32 %v400, %v461
    %v494 = vmul.f32 %v404, %v462
    %v495 = vmul.f32 %v406, %v463
    %v496 = vmul.f32 %v408, %v464
    %v497 = vmul.f32 %v410, %v465
    %v498 = vmul.f32 %v414, %v466
    %v499 = vmul.f32 %v416, %v467
    %v500 = vmul.f32 %v418, %v468
    %v501 = vmul.f32 %v420, %v469
    %v502 = vadd.f32 %v470, %v472
    %v503 = vadd.f32 %v502, %v474
    %v504 = vadd.f32 %v503, %v476
    %v505 = vadd.f32 %v504, %v478
    %v506 = vadd.f32 %v505, %v480
    %v507 = vadd.f32 %v506, %v482
    %v508 = vadd.f32 %v507, %v484
    %v509 = vadd.f32 %v508, %v486
    %v510 = vadd.f32 %v509, %v488
    %v511 = vadd.f32 %v510, %v490
    %v512 = vadd.f32 %v511, %v492
    %v513 = vadd.f32 %v512, %v494
    %v514 = vadd.f32 %v513, %v496
    %v515 = vadd.f32 %v514, %v498
    %v516 = vadd.f32 %v515, %v500
    %v517 = vrot.slane %v516, 4
    %v518 = vadd.f32 %v516, %v517
    %v519 = vrot.slane %v518, 2
    %v520 = vadd.f32 %v518, %v519
    %v521 = vrot.slane %v520, 1
    %v522 = vadd.f32 %v520, %v521
    %v523 = vadd.f32 %v471, %v473
    %v524 = vadd.f32 %v523, %v475
    %v525 = vadd.f32 %v524, %v477
    %v526 = vadd.f32 %v525, %v479
    %v527 = vadd.f32 %v526, %v481
    %v528 = vadd.f32 %v527, %v483
    %v529 = vadd.f32 %v528, %v485
    %v530 = vadd.f32 %v529, %v487
    %v531 = vadd.f32 %v530, %v489
    %v532 = vadd.f32 %v531, %v491
    %v533 = vadd.f32 %v532, %v493
    %v534 = vadd.f32 %v533, %v495
    %v535 = vadd.f32 %v534, %v497
    %v536 = vadd.f32 %v535, %v499
    %v537 = vadd.f32 %v536, %v501
    %v538 = vrot.slane %v537, 4
    %v539 = vadd.f32 %v537, %v538
    %v540 = vrot.slane %v539, 2
    %v541 = vadd.f32 %v539, %v540
    %v542 = vrot.slane %v541, 1
    %v543 = vadd.f32 %v541, %v542
    %v544 = vmul.f32 %v344, %v344
    %v545 = vmul.f32 %v346, %v346
    %v546 = vmul.f32 %v348, %v348
    %v547 = vmul.f32 %v350, %v350
    %v548 = vmul.f32 %v354, %v354
    %v549 = vmul.f32 %v356, %v356
    %v550 = vmul.f32 %v358, %v358
    %v551 = vmul.f32 %v360, %v360
    %v552 = vmul.f32 %v364, %v364
    %v553 = vmul.f32 %v366, %v366
    %v554 = vmul.f32 %v368, %v368
    %v555 = vmul.f32 %v370, %v370
    %v556 = vmul.f32 %v374, %v374
    %v557 = vmul.f32 %v376, %v376
    %v558 = vmul.f32 %v378, %v378
    %v559 = vmul.f32 %v380, %v380
    %v560 = vmul.f32 %v384, %v384
    %v561 = vmul.f32 %v386, %v386
    %v562 = vmul.f32 %v388, %v388
    %v563 = vmul.f32 %v390, %v390
    %v564 = vmul.f32 %v394, %v394
    %v565 = vmul.f32 %v396, %v396
    %v566 = vmul.f32 %v398, %v398
    %v567 = vmul.f32 %v400, %v400
    %v568 = vmul.f32 %v404, %v404
    %v569 = vmul.f32 %v406, %v406
    %v570 = vmul.f32 %v408, %v408
    %v571 = vmul.f32 %v410, %v410
    %v572 = vmul.f32 %v414, %v414
    %v573 = vmul.f32 %v416, %v416
    %v574 = vmul.f32 %v418, %v418
    %v575 = vmul.f32 %v420, %v420
    %v576 = vadd.f32 %v544, %v546
    %v577 = vadd.f32 %v576, %v548
    %v578 = vadd.f32 %v577, %v550
    %v579 = vadd.f32 %v578, %v552
    %v580 = vadd.f32 %v579, %v554
    %v581 = vadd.f32 %v580, %v556
    %v582 = vadd.f32 %v581, %v558
    %v583 = vadd.f32 %v582, %v560
    %v584 = vadd.f32 %v583, %v562
    %v585 = vadd.f32 %v584, %v564
    %v586 = vadd.f32 %v585, %v566
    %v587 = vadd.f32 %v586, %v568
    %v588 = vadd.f32 %v587, %v570
    %v589 = vadd.f32 %v588, %v572
    %v590 = vadd.f32 %v589, %v574
    %v591 = vrot.slane %v590, 4
    %v592 = vadd.f32 %v590, %v591
    %v593 = vrot.slane %v592, 2
    %v594 = vadd.f32 %v592, %v593
    %v595 = vrot.slane %v594, 1
    %v596 = vadd.f32 %v594, %v595
    %v597 = vadd.f32 %v545, %v547
    %v598 = vadd.f32 %v597, %v549
    %v599 = vadd.f32 %v598, %v551
    %v600 = vadd.f32 %v599, %v553
    %v601 = vadd.f32 %v600, %v555
    %v602 = vadd.f32 %v601, %v557
    %v603 = vadd.f32 %v602, %v559
    %v604 = vadd.f32 %v603, %v561
    %v605 = vadd.f32 %v604, %v563
    %v606 = vadd.f32 %v605, %v565
    %v607 = vadd.f32 %v606, %v567
    %v608 = vadd.f32 %v607, %v569
    %v609 = vadd.f32 %v608, %v571
    %v610 = vadd.f32 %v609, %v573
    %v611 = vadd.f32 %v610, %v575
    %v612 = vrot.slane %v611, 4
    %v613 = vadd.f32 %v611, %v612
    %v614 = vrot.slane %v613, 2
    %v615 = vadd.f32 %v613, %v614
    %v616 = vrot.slane %v615, 1
    %v617 = vadd.f32 %v615, %v616
    %v618 = vmul.f32 %v438, %v438
    %v619 = vmul.f32 %v439, %v439
    %v620 = vmul.f32 %v440, %v440
    %v621 = vmul.f32 %v441, %v441
    %v622 = vmul.f32 %v442, %v442
    %v623 = vmul.f32 %v443, %v443
    %v624 = vmul.f32 %v444, %v444
    %v625 = vmul.f32 %v445, %v445
    %v626 = vmul.f32 %v446, %v446
    %v627 = vmul.f32 %v447, %v447
    %v628 = vmul.f32 %v448, %v448
    %v629 = vmul.f32 %v449, %v449
    %v630 = vmul.f32 %v450, %v450
    %v631 = vmul.f32 %v451, %v451
    %v632 = vmul.f32 %v452, %v452
    %v633 = vmul.f32 %v453, %v453
    %v634 = vmul.f32 %v454, %v454
    %v635 = vmul.f32 %v455, %v455
    %v636 = vmul.f32 %v456, %v456
    %v637 = vmul.f32 %v457, %v457
    %v638 = vmul.f32 %v458, %v458
    %v639 = vmul.f32 %v459, %v459
    %v640 = vmul.f32 %v460, %v460
    %v641 = vmul.f32 %v461, %v461
    %v642 = vmul.f32 %v462, %v462
    %v643 = vmul.f32 %v463, %v463
    %v644 = vmul.f32 %v464, %v464
    %v645 = vmul.f32 %v465, %v465
    %v646 = vmul.f32 %v466, %v466
    %v647 = vmul.f32 %v467, %v467
    %v648 = vmul.f32 %v468, %v468
    %v649 = vmul.f32 %v469, %v469
    %v650 = vadd.f32 %v618, %v620
    %v651 = vadd.f32 %v650, %v622
    %v652 = vadd.f32 %v651, %v624
    %v653 = vadd.f32 %v652, %v626
    %v654 = vadd.f32 %v653, %v628
    %v655 = vadd.f32 %v654, %v630
    %v656 = vadd.f32 %v655, %v632
    %v657 = vadd.f32 %v656, %v634
    %v658 = vadd.f32 %v657, %v636
    %v659 = vadd.f32 %v658, %v638
    %v660 = vadd.f32 %v659, %v640
    %v661 = vadd.f32 %v660, %v642
    %v662 = vadd.f32 %v661, %v644
    %v663 = vadd.f32 %v662, %v646
    %v664 = vadd.f32 %v663, %v648
    %v665 = vrot.slane %v664, 4
    %v666 = vadd.f32 %v664, %v665
    %v667 = vrot.slane %v666, 2
    %v668 = vadd.f32 %v666, %v667
    %v669 = vrot.slane %v668, 1
    %v670 = vadd.f32 %v668, %v669
    %v671 = vadd.f32 %v619, %v621
    %v672 = vadd.f32 %v671, %v623
    %v673 = vadd.f32 %v672, %v625
    %v674 = vadd.f32 %v673, %v627
    %v675 = vadd.f32 %v674, %v629
    %v676 = vadd.f32 %v675, %v631
    %v677 = vadd.f32 %v676, %v633
    %v678 = vadd.f32 %v677, %v635
    %v679 = vadd.f32 %v678, %v637
    %v680 = vadd.f32 %v679, %v639
    %v681 = vadd.f32 %v680, %v641
    %v682 = vadd.f32 %v681, %v643
    %v683 = vadd.f32 %v682, %v645
    %v684 = vadd.f32 %v683, %v647
    %v685 = vadd.f32 %v684, %v649
    %v686 = vrot.slane %v685, 4
    %v687 = vadd.f32 %v685, %v686
    %v688 = vrot.slane %v687, 2
    %v689 = vadd.f32 %v687, %v688
    %v690 = vrot.slane %v689, 1
    %v691 = vadd.f32 %v689, %v690
    %v692 = vmul.f32 %v596, %v670
    %v693 = vmul.f32 %v617, %v691
    %v694 = vmax.f32 %v692, 1e-16
    %v695 = vmax.f32 %v693, 1e-16
    %v696 = vrsqrt.pop %v694
    %v697 = vrsqrt.pop %v695
    %v698 = vmul.f32 %v522, %v696
    %v699 = vmul.f32 %v543, %v697
    %v702 = vcombine.low %v698, %v699
    %v704 = vunpack.c.l.s4 1966171168
    %v705 = vunpack.c.0.s8 %v704
    %v706 = vlaneseq
    %v707 = vshrl.u32 %v706, 7
    %v708 = vsub.s32 %v705, %v707
    %v709 = vrot.slane %v702, %v708
    %v711 = vunpack.c.l.s4 1966171168
    %v712 = vunpack.c.0.s8 %v711
    %v713 = vlaneseq
    %v714 = vshrl.u32 %v713, 7
    %v715 = vsub.s32 %v712, %v714
    %v716 = vrot.slane %v709, %v715
    %v718 = vlaneseq
    %vm719 = vcmp.ge.s32.totalorder %v718, 0
    %vm720 = vcmp.lt.s32.totalorder %v718, 256
    %vm721 = vmand %vm719, %vm720
    %722 = vst.msk [vmem:[#allocation2] sm:$0x3] %vm721, %v716
    // Predicated region
    $region18: #{_forward_from_transposed.1} parent=1 // pred_check
      _
    $region19: #{_forward_from_transposed.1} parent=1 // pred_check_branch
      %724 = sbr.rel (0) target = $region21
    $region20: #{_forward_from_transposed.1} parent=1 // pred_region
      %s726 = ssub.s32 32, 32
      %727 = vsyncadd [#allocation3], %s726
      %s729 = sshll.u32 [#allocation2], 4
      %s730 = int_to_ptr.vmem [resolvable:$true] %s729
      %732 = dma.vmem_to_hbm [thread:$0]  %s730, 32, %s4, [#allocation3]
    $region21: #{_forward_from_transposed.1} parent=1 // pred_fallthru
      _
    // Predicated region
    $region22: #{_forward_from_transposed.1} parent=1 // pred_check
      _
    $region23: #{_forward_from_transposed.1} parent=1 // pred_check_branch
      %734 = sbr.rel (0) target = $region25
    $region24: #{_forward_from_transposed.1} parent=1 // pred_region
      %735 = dma.done [#allocation3], 32
    $region25: #{_forward_from_transposed.1} parent=1 // pred_fallthru
      _
    %736 = vsyncpa [#allocation3], 1

</llo_original>
